<compile_context>
chip_gen: v7x
topology: tpu7x:2x2x1
jax: 0.10.0
libtpu: 0.0.40
codegen_flags: <defaults>
</compile_context>

<pallas_src>
import functools

import jax
import jax.numpy as jnp
from jax.experimental import pallas as pl
from jax.experimental.pallas import tpu as pltpu


def _round_up(x, m):
    return (x + m - 1) // m * m


def _detect_v7x():
    # Trace-time / import-time chip query; only used to pick the batch tile so a
    # mid-size batch still produces >= 2 grid steps on the 2-TC v7x megacore.
    try:
        return "v7" in jax.devices()[0].device_kind.lower()
    except Exception:  # pragma: no cover - be robust on exotic backends
        return False


_IS_V7X = _detect_v7x()


def _mlp_kernel(x_ref, w1_ref, b1_ref, w2_ref, b2_ref, o_ref):
    """Fused Linear -> ReLU -> Linear on one batch tile.

    MXU inputs are cast to the weight dtype (f32 or bf16); both dots accumulate
    in f32 and the bias/ReLU epilogue stays on the f32 accumulator.  The only
    down-cast happens at the final store.
    """
    # Hidden layer: x @ W1 + b1, ReLU.
    x = x_ref[...].astype(w1_ref.dtype)
    h = jnp.dot(x, w1_ref[...], preferred_element_type=jnp.float32)
    h = jnp.maximum(h + b1_ref[...].astype(jnp.float32), 0.0)  # f32 VPU epilogue
    # Output layer: h @ W2 + b2.  Output block last dim == full out_size, so the
    # store is exactly 1x output bytes (masked narrow store, hidden under DMA).
    out = jnp.dot(h.astype(w2_ref.dtype), w2_ref[...],
                  preferred_element_type=jnp.float32)
    out = out + b2_ref[...].astype(jnp.float32)
    o_ref[...] = out.astype(o_ref.dtype)


@functools.partial(jax.jit, static_argnames=("batch_tile",))
def regression_model_forward(x, w1, b1, w2, b2, *, batch_tile=None):
    """Fused forward of RegressionModel(input_size, output_size, layer_sizes=[hidden]).

    x : (B, input_size)
    w1: (input_size, hidden)       b1: (1, hidden)
    w2: (hidden, output_size)      b2: (1, output_size)
    returns (B, output_size) in x.dtype.
    Weights are stored transposed vs. torch.nn.Linear, i.e. (in, out), so the
    kernel computes x @ W + b directly on the MXU.
    """
    B, in_size = x.shape
    _, hidden = w1.shape
    _, out_size = w2.shape

    # --- Batch tile selection -------------------------------------------------
    # Either a multiple of 8 (f32 sublane) or the full batch dim (always legal).
    if batch_tile is None:
        cap = 2048  # ~0.3 MiB double-buffered x tile at in_size=32; huge VMEM headroom
        if _IS_V7X and B >= 64:
            # Guarantee >= 2 grid steps so "parallel" shards across both v7x TCs.
            cap = min(cap, _round_up(pl.cdiv(B, 2), 8))
        tb = B if B <= cap else cap
    else:
        tb = int(batch_tile)
    grid = (pl.cdiv(B, tb),)

    # Advisory cost hint so XLA schedules sensibly around the custom call.
    flops = 2 * B * in_size * hidden + 2 * B * hidden * out_size
    bytes_accessed = (x.size * x.dtype.itemsize
                      + w1.size * w1.dtype.itemsize + b1.size * b1.dtype.itemsize
                      + w2.size * w2.dtype.itemsize + b2.size * b2.dtype.itemsize
                      + B * out_size * x.dtype.itemsize)

    # Weights/biases never change across the grid -> single VMEM buffer.
    resident = functools.partial(pl.BlockSpec, pipeline_mode=pl.Buffered(1))

    return pl.pallas_call(
        _mlp_kernel,
        out_shape=jax.ShapeDtypeStruct((B, out_size), x.dtype),
        grid=grid,
        in_specs=[
            pl.BlockSpec((tb, in_size), lambda i: (i, 0)),      # x tile over batch
            resident((in_size, hidden), lambda i: (0, 0)),      # W1 resident
            resident((1, hidden), lambda i: (0, 0)),            # b1 resident
            resident((hidden, out_size), lambda i: (0, 0)),     # W2 resident
            resident((1, out_size), lambda i: (0, 0)),          # b2 resident
        ],
        out_specs=pl.BlockSpec((tb, out_size), lambda i: (i, 0)),  # unpadded output
        compiler_params=pltpu.CompilerParams(
            dimension_semantics=("parallel",),                  # megacore-shardable batch axis
        ),
        cost_estimate=pl.CostEstimate(
            flops=flops, transcendentals=0, bytes_accessed=bytes_accessed),
    )(x, w1, b1, w2, b2)


def init_params(key, input_size, hidden, output_size, dtype=jnp.float32):
    """torch.nn.Linear-style init: U[-1/sqrt(fan_in), 1/sqrt(fan_in)], stored (in, out)."""
    k1, k2, k3, k4 = jax.random.split(key, 4)
    bound1 = 1.0 / jnp.sqrt(input_size)
    bound2 = 1.0 / jnp.sqrt(hidden)
    w1 = jax.random.uniform(k1, (input_size, hidden), jnp.float32, -bound1, bound1).astype(dtype)
    b1 = jax.random.uniform(k2, (1, hidden), jnp.float32, -bound1, bound1).astype(dtype)
    w2 = jax.random.uniform(k3, (hidden, output_size), jnp.float32, -bound2, bound2).astype(dtype)
    b2 = jax.random.uniform(k4, (1, output_size), jnp.float32, -bound2, bound2).astype(dtype)
    return w1, b1, w2, b2


def reference_forward(x, w1, b1, w2, b2):
    """Pure-JAX (f32) reference of RegressionModel.forward."""
    xf = x.astype(jnp.float32)
    h = jnp.maximum(xf @ w1.astype(jnp.float32) + b1.astype(jnp.float32), 0.0)
    return h @ w2.astype(jnp.float32) + b2.astype(jnp.float32)


if __name__ == "__main__":
    # RegressionModel(input_size=32, output_size=8, layer_sizes=[64]).
    batch, input_size, hidden, output_size = 16, 32, 64, 8

    key = jax.random.PRNGKey(0)
    kx, kp = jax.random.split(key)
    x = jax.random.normal(kx, (batch, input_size), jnp.float32)
    w1, b1, w2, b2 = init_params(kp, input_size, hidden, output_size)

    # --- f32 path: must match the f32 reference tightly. ----------------------
    out = jax.block_until_ready(regression_model_forward(x, w1, b1, w2, b2))
    ref = reference_forward(x, w1, b1, w2, b2)
    assert out.shape == (batch, output_size), out.shape
    assert jnp.allclose(out, ref, atol=1e-4, rtol=1e-4), "f32 mismatch vs reference"

    # --- Uneven final batch tile (B % tb != 0): locks in masked partial-block
    #     writeback correctness. -------------------------------------------------
    B2 = 50
    x2 = jax.random.normal(jax.random.PRNGKey(1), (B2, input_size), jnp.float32)
    out2 = jax.block_until_ready(
        regression_model_forward(x2, w1, b1, w2, b2, batch_tile=16))
    ref2 = reference_forward(x2, w1, b1, w2, b2)
    assert out2.shape == (B2, output_size), out2.shape
    assert jnp.allclose(out2, ref2, atol=1e-4, rtol=1e-4), "uneven-tile mismatch"

    # --- bf16-weight path (v6e/v7x recommendation): f32 accumulation, f32
    #     epilogue, compared against the reference on the same quantized weights.
    bf = jnp.bfloat16
    w1b, b1b, w2b, b2b = (p.astype(bf) for p in (w1, b1, w2, b2))
    out_bf = jax.block_until_ready(regression_model_forward(x, w1b, b1b, w2b, b2b))
    ref_bf = reference_forward(x, w1b, b1b, w2b, b2b)
    assert out_bf.dtype == jnp.float32
    assert jnp.allclose(out_bf, ref_bf, atol=5e-2, rtol=5e-2), "bf16-weight mismatch"

    # --- Fully bf16 streaming (x and output bf16 too): the bandwidth lever for
    #     large B on v6e/v7x. ----------------------------------------------------
    out_bfx = jax.block_until_ready(
        regression_model_forward(x.astype(bf), w1b, b1b, w2b, b2b))
    assert out_bfx.dtype == bf
    assert jnp.allclose(out_bfx.astype(jnp.float32), ref_bf, atol=1e-1, rtol=1e-1), \
        "bf16-streaming mismatch"

    print("KERNEL_OK")
</pallas_src>

<mosaic_0001>
module attributes {stable_mosaic.version = 11 : i64} {
  func.func @_mlp_kernel(%arg0: i32, %arg1: memref<16x32xf32, #tpu.memory_space<vmem>>, %arg2: memref<32x64xf32, #tpu.memory_space<vmem>>, %arg3: memref<1x64xf32, #tpu.memory_space<vmem>>, %arg4: memref<64x8xf32, #tpu.memory_space<vmem>>, %arg5: memref<1x8xf32, #tpu.memory_space<vmem>>, %arg6: memref<16x8xf32, #tpu.memory_space<vmem>>) attributes {dimension_semantics = [#tpu.dimension_semantics<parallel>], iteration_bounds = array<i64: 1>, scalar_prefetch = 0 : i64, scratch_operands = 0 : i64, tpu.core_type = #tpu.core_type<tc>, window_params = [{transform_indices = @transform_0, window_bounds = array<i64: 16, 32>}, {pipeline_mode = #tpu.pipeline_mode<synchronous>, transform_indices = @transform_1, window_bounds = array<i64: 32, 64>}, {pipeline_mode = #tpu.pipeline_mode<synchronous>, transform_indices = @transform_2, window_bounds = array<i64: 1, 64>}, {pipeline_mode = #tpu.pipeline_mode<synchronous>, transform_indices = @transform_3, window_bounds = array<i64: 64, 8>}, {pipeline_mode = #tpu.pipeline_mode<synchronous>, transform_indices = @transform_4, window_bounds = array<i64: 1, 8>}, {transform_indices = @transform_5, window_bounds = array<i64: 16, 8>}]} {
    %c0 = arith.constant 0 : index
    %c0_0 = arith.constant 0 : index
    %0 = vector.load %arg1[%c0, %c0_0] : memref<16x32xf32, #tpu.memory_space<vmem>>, vector<16x32xf32>
    %c0_1 = arith.constant 0 : index
    %c0_2 = arith.constant 0 : index
    %1 = vector.load %arg2[%c0_1, %c0_2] : memref<32x64xf32, #tpu.memory_space<vmem>>, vector<32x64xf32>
    %cst = arith.constant dense<0.000000e+00> : vector<16x64xf32>
    %2 = tpu.matmul %0, %1, %cst {dimension_numbers = #tpu.dot_dimension_numbers<[1], [0], [0], [1], [0, 0, 1, 1], [], []>} : vector<16x32xf32>, vector<32x64xf32>, vector<16x64xf32> -> vector<16x64xf32>
    %c0_3 = arith.constant 0 : index
    %c0_4 = arith.constant 0 : index
    %3 = vector.load %arg3[%c0_3, %c0_4] : memref<1x64xf32, #tpu.memory_space<vmem>>, vector<1x64xf32>
    %4 = vector.broadcast %3 : vector<1x64xf32> to vector<16x64xf32>
    %5 = arith.addf %2, %4 : vector<16x64xf32>
    %cst_5 = arith.constant 0.000000e+00 : f32
    %6 = vector.broadcast %cst_5 : f32 to vector<16x64xf32>
    %7 = arith.maximumf %5, %6 : vector<16x64xf32>
    %c0_6 = arith.constant 0 : index
    %c0_7 = arith.constant 0 : index
    %8 = vector.load %arg4[%c0_6, %c0_7] : memref<64x8xf32, #tpu.memory_space<vmem>>, vector<64x8xf32>
    %cst_8 = arith.constant dense<0.000000e+00> : vector<16x8xf32>
    %9 = tpu.matmul %7, %8, %cst_8 {dimension_numbers = #tpu.dot_dimension_numbers<[1], [0], [0], [1], [0, 0, 1, 1], [], []>} : vector<16x64xf32>, vector<64x8xf32>, vector<16x8xf32> -> vector<16x8xf32>
    %c0_9 = arith.constant 0 : index
    %c0_10 = arith.constant 0 : index
    %10 = vector.load %arg5[%c0_9, %c0_10] : memref<1x8xf32, #tpu.memory_space<vmem>>, vector<1x8xf32>
    %11 = vector.broadcast %10 : vector<1x8xf32> to vector<16x8xf32>
    %12 = arith.addf %9, %11 : vector<16x8xf32>
    %c0_11 = arith.constant 0 : index
    %c0_12 = arith.constant 0 : index
    %13 = vector.load %arg6[%c0_11, %c0_12] : memref<16x8xf32, #tpu.memory_space<vmem>>, vector<16x8xf32>
    tpu.vector_store %arg6[%c0_11, %c0_12], %12 {strides = array<i32>} : memref<16x8xf32, #tpu.memory_space<vmem>>, vector<16x8xf32>,
    return
  }
  func.func @transform_0(%arg0: i32) -> (i32, i32) {
    %c0_i32 = arith.constant 0 : i32
    %c0_i32_0 = arith.constant 0 : i32
    return %arg0, %c0_i32 : i32, i32
  }
  func.func @transform_1(%arg0: i32) -> (i32, i32) {
    %c0_i32 = arith.constant 0 : i32
    %c0_i32_0 = arith.constant 0 : i32
    %c0_i32_1 = arith.constant 0 : i32
    return %c0_i32, %c0_i32_0 : i32, i32
  }
  func.func @transform_2(%arg0: i32) -> (i32, i32) {
    %c0_i32 = arith.constant 0 : i32
    %c0_i32_0 = arith.constant 0 : i32
    %c0_i32_1 = arith.constant 0 : i32
    return %c0_i32, %c0_i32_0 : i32, i32
  }
  func.func @transform_3(%arg0: i32) -> (i32, i32) {
    %c0_i32 = arith.constant 0 : i32
    %c0_i32_0 = arith.constant 0 : i32
    %c0_i32_1 = arith.constant 0 : i32
    return %c0_i32, %c0_i32_0 : i32, i32
  }
  func.func @transform_4(%arg0: i32) -> (i32, i32) {
    %c0_i32 = arith.constant 0 : i32
    %c0_i32_0 = arith.constant 0 : i32
    %c0_i32_1 = arith.constant 0 : i32
    return %c0_i32, %c0_i32_0 : i32, i32
  }
  func.func @transform_5(%arg0: i32) -> (i32, i32) {
    %c0_i32 = arith.constant 0 : i32
    %c0_i32_0 = arith.constant 0 : i32
    return %arg0, %c0_i32 : i32, i32
  }
}

</mosaic_0001>

<llo_original>
// kernel: regression_model_forward.1
$region0: #{regression_model_forward.1}
  #allocation0 [shape = 'u32[]', space=smem, size = 0x4, offset = 0x4, fixed_abs, tag = 'smem constant byte address 0x4 - core index']
  #allocation1 [shape = 'u32[144,128]{1,0:T(1,128)}', space=vmem, size = 0x12000, scoped, tag = 'internal scratch']
  %s0 = inlined_call_operand.vmem [shape: f32[16,32], index: 0, kind: input, shape index: {}]
  %s1 = inlined_call_operand.vmem [shape: f32[32,64], index: 1, kind: input, shape index: {}]
  %s2 = inlined_call_operand.vmem [shape: f32[1,64], index: 2, kind: input, shape index: {}]
  %s3 = inlined_call_operand.vmem [shape: f32[64,8], index: 3, kind: input, shape index: {}]
  %s4 = inlined_call_operand.vmem [shape: f32[1,8], index: 4, kind: input, shape index: {}]
  %s5 = inlined_call_operand.vmem [shape: f32[16,8], index: 5, kind: output, shape index: {}]
  %s6 = sld [smem:[#allocation0]]
  $region30: #{regression_model_forward.1} parent=0
    _
  %s8 = ssub.s32 1, %s6
  %s9 = scalar_select 0, %s8, %s6
  // Predicated region
  $region2: #{regression_model_forward.1} parent=0 // pred_check
    _
  $region3: #{regression_model_forward.1} parent=0 // pred_check_branch
    %11 = sbr.rel (0) target = $region5
  $region4: #{regression_model_forward.1} parent=0 // pred_region
    _
  $region5: #{regression_model_forward.1} parent=0 // pred_fallthru
    _
  // Predicated region
  $region6: #{regression_model_forward.1} parent=0 // pred_check
    _
  $region7: #{regression_model_forward.1} parent=0 // pred_check_branch
    %13 = sbr.rel (0) target = $region9
  $region8: #{regression_model_forward.1} parent=0 // pred_region
    _
  $region9: #{regression_model_forward.1} parent=0 // pred_fallthru
    _
  // Predicated region
  $region10: #{regression_model_forward.1} parent=0 // pred_check
    _
  $region11: #{regression_model_forward.1} parent=0 // pred_check_branch
    %15 = sbr.rel (0) target = $region13
  $region12: #{regression_model_forward.1} parent=0 // pred_region
    _
  $region13: #{regression_model_forward.1} parent=0 // pred_fallthru
    _
  // Predicated region
  $region14: #{regression_model_forward.1} parent=0 // pred_check
    _
  $region15: #{regression_model_forward.1} parent=0 // pred_check_branch
    %17 = sbr.rel (0) target = $region17
  $region16: #{regression_model_forward.1} parent=0 // pred_region
    _
  $region17: #{regression_model_forward.1} parent=0 // pred_fallthru
    _
  // Predicated region
  $region18: #{regression_model_forward.1} parent=0 // pred_check
    _
  $region19: #{regression_model_forward.1} parent=0 // pred_check_branch
    %19 = sbr.rel (0) target = $region21
  $region20: #{regression_model_forward.1} parent=0 // pred_region
    _
  $region21: #{regression_model_forward.1} parent=0 // pred_fallthru
    _
  %v20 = vld [vmem:[%s0] sm:$0xff]
  %v21 = vld [vmem:[%s0 + $0x8] sm:$0xff]
  %v22 = vld [vmem:[%s1] sm:$0xff]
  %v23 = vld [vmem:[%s1 + $0x8] sm:$0xff]
  %v24 = vld [vmem:[%s1 + $0x10] sm:$0xff]
  %v25 = vld [vmem:[%s1 + $0x18] sm:$0xff]
  %v26 = vld [vmem:[%s2] sm:$0x1]
  %v28 = vlaneseq
  %v29 = vshrl.u32 %v28, 7
  %v30 = vsub.s32 0, %v29
  %v31 = vrot.slane %v26, %v30
  %vm33 = vcmask 261120
  %v35 = vsel %vm33, %v20, 0
  %v38 = vsel %vm33, %v21, 0
  %40 = vmatprep.subr.mxu0 0.0
  %41 = vmatpush1.msra.mxu0 %v22
  %42 = vmatprep.subr.mxu0 0.0
  %43 = vmatpush1.msra.mxu0 %v23
  %44 = vmatprep.subr.mxu0 0.0
  %45 = vmatpush1.msra.mxu0 %v24
  %46 = vmatprep.subr.mxu0 0.0
  %47 = vmatpush1.msra.mxu0 %v25
  %48 = vmatprep.subr.mxu0 0.0
  %49 = vmatpush1.msra.mxu0 0.0
  %50 = vmatprep.subr.mxu0 0.0
  %51 = vmatpush1.msra.mxu0 0.0
  %52 = vmatprep.subr.mxu0 0.0
  %53 = vmatpush1.msra.mxu0 0.0
  %54 = vmatprep.subr.mxu0 0.0
  %55 = vmatpush1.msra.mxu0 0.0
  %56 = vmatprep.subr.mxu0 0.0
  %57 = vmatpush1.msra.mxu0 0.0
  %58 = vmatprep.subr.mxu0 0.0
  %59 = vmatpush1.msra.mxu0 0.0
  %60 = vmatprep.subr.mxu0 0.0
  %61 = vmatpush1.msra.mxu0 0.0
  %62 = vmatprep.subr.mxu0 0.0
  %63 = vmatpush1.msra.mxu0 0.0
  %64 = vmatprep.subr.mxu0 0.0
  %65 = vmatpush1.msra.mxu0 0.0
  %66 = vmatprep.subr.mxu0 0.0
  %67 = vmatpush1.msra.mxu0 0.0
  %68 = vmatprep.subr.mxu0 0.0
  %69 = vmatpush1.msra.mxu0 0.0
  %70 = vmatprep.subr.mxu0 0.0
  %71 = vmatpush1.msra.mxu0 0.0
  %72 = vmatprep.subr.mxu0 0.0
  %73 = vmatpush1.msra.mxu0 0.0
  %74 = vmatprep.subr.mxu0 0.0
  %75 = vmatpush1.msra.mxu0 0.0
  %76 = vmatprep.subr.mxu0 0.0
  %77 = vmatpush1.msra.mxu0 0.0
  %78 = vmatprep.subr.mxu0 0.0
  %79 = vmatpush1.msra.mxu0 0.0
  %80 = vmatprep.subr.mxu0 0.0
  %81 = vmatpush1.msra.mxu0 0.0
  %82 = vmatprep.subr.mxu0 0.0
  %83 = vmatpush1.msra.mxu0 0.0
  %84 = vmatprep.subr.mxu0 0.0
  %85 = vmatpush1.msra.mxu0 0.0
  %86 = vmatprep.subr.mxu0 0.0
  %87 = vmatpush1.msra.mxu0 0.0
  %88 = vmatprep.subr.mxu0 0.0
  %89 = vmatpush1.msra.mxu0 0.0
  %90 = vmatprep.subr.mxu0 0.0
  %91 = vmatpush1.msra.mxu0 0.0
  %92 = vmatprep.subr.mxu0 0.0
  %93 = vmatpush1.msra.mxu0 0.0
  %94 = vmatprep.subr.mxu0 0.0
  %95 = vmatpush1.msra.mxu0 0.0
  %96 = vmatprep.subr.mxu0 0.0
  %97 = vmatpush1.msra.mxu0 0.0
  %98 = vmatprep.subr.mxu0 0.0
  %99 = vmatpush1.msra.mxu0 0.0
  %100 = vmatprep.subr.mxu0 0.0
  %101 = vmatpush1.msra.mxu0 0.0
  %102 = vmatprep.subr.mxu0 0.0
  %103 = vmatpush1.msra.mxu0 0.0
  %104 = vmatprep.mubr.f32.mxu0 0.0
  %105 = vmatmul.mubr.f32.gmra.mrb[0].mxu0 %v35
  %v106 = vpop.f32.mrb[0].mxu0
  %v107 = vadd.f32 %v31, %v106
  %v108 = vpop.f32.mrb[0].mxu0
  %109 = vmatprep.mubr.f32.mxu0 0.0
  %110 = vmatmul.mubr.f32.gmra.mrb[0].mxu0 %v38
  %v111 = vpop.f32.mrb[0].mxu0
  %v112 = vadd.f32 %v31, %v111
  %v113 = vpop.f32.mrb[0].mxu0
  %114 = vdwg.mxu0
  %v115 = vmax.f32 %v107, 0.0
  %v116 = vmax.f32 %v112, 0.0
  %v117 = vld [vmem:[%s3] sm:$0xff]
  %v118 = vld [vmem:[%s3 + $0x8] sm:$0xff]
  %v119 = vld [vmem:[%s3 + $0x10] sm:$0xff]
  %v120 = vld [vmem:[%s3 + $0x18] sm:$0xff]
  %v121 = vld [vmem:[%s3 + $0x20] sm:$0xff]
  %v122 = vld [vmem:[%s3 + $0x28] sm:$0xff]
  %v123 = vld [vmem:[%s3 + $0x30] sm:$0xff]
  %v124 = vld [vmem:[%s3 + $0x38] sm:$0xff]
  %v125 = vld [vmem:[%s4] sm:$0x1]
  %v127 = vlaneseq
  %v128 = vshrl.u32 %v127, 7
  %v129 = vsub.s32 0, %v128
  %v130 = vrot.slane %v125, %v129
  %vm132 = vcmask 523264
  %v134 = vsel %vm132, %v115, 0
  %v137 = vsel %vm132, %v116, 0
  %139 = vmatprep.subr.mxu0 0.0
  %140 = vmatpush1.msra.mxu0 %v117
  %141 = vmatprep.subr.mxu0 0.0
  %142 = vmatpush1.msra.mxu0 %v118
  %143 = vmatprep.subr.mxu0 0.0
  %144 = vmatpush1.msra.mxu0 %v119
  %145 = vmatprep.subr.mxu0 0.0
  %146 = vmatpush1.msra.mxu0 %v120
  %147 = vmatprep.subr.mxu0 0.0
  %148 = vmatpush1.msra.mxu0 %v121
  %149 = vmatprep.subr.mxu0 0.0
  %150 = vmatpush1.msra.mxu0 %v122
  %151 = vmatprep.subr.mxu0 0.0
  %152 = vmatpush1.msra.mxu0 %v123
  %153 = vmatprep.subr.mxu0 0.0
  %154 = vmatpush1.msra.mxu0 %v124
  %155 = vmatprep.subr.mxu0 0.0
  %156 = vmatpush1.msra.mxu0 0.0
  %157 = vmatprep.subr.mxu0 0.0
  %158 = vmatpush1.msra.mxu0 0.0
  %159 = vmatprep.subr.mxu0 0.0
  %160 = vmatpush1.msra.mxu0 0.0
  %161 = vmatprep.subr.mxu0 0.0
  %162 = vmatpush1.msra.mxu0 0.0
  %163 = vmatprep.subr.mxu0 0.0
  %164 = vmatpush1.msra.mxu0 0.0
  %165 = vmatprep.subr.mxu0 0.0
  %166 = vmatpush1.msra.mxu0 0.0
  %167 = vmatprep.subr.mxu0 0.0
  %168 = vmatpush1.msra.mxu0 0.0
  %169 = vmatprep.subr.mxu0 0.0
  %170 = vmatpush1.msra.mxu0 0.0
  %171 = vmatprep.subr.mxu0 0.0
  %172 = vmatpush1.msra.mxu0 0.0
  %173 = vmatprep.subr.mxu0 0.0
  %174 = vmatpush1.msra.mxu0 0.0
  %175 = vmatprep.subr.mxu0 0.0
  %176 = vmatpush1.msra.mxu0 0.0
  %177 = vmatprep.subr.mxu0 0.0
  %178 = vmatpush1.msra.mxu0 0.0
  %179 = vmatprep.subr.mxu0 0.0
  %180 = vmatpush1.msra.mxu0 0.0
  %181 = vmatprep.subr.mxu0 0.0
  %182 = vmatpush1.msra.mxu0 0.0
  %183 = vmatprep.subr.mxu0 0.0
  %184 = vmatpush1.msra.mxu0 0.0
  %185 = vmatprep.subr.mxu0 0.0
  %186 = vmatpush1.msra.mxu0 0.0
  %187 = vmatprep.subr.mxu0 0.0
  %188 = vmatpush1.msra.mxu0 0.0
  %189 = vmatprep.subr.mxu0 0.0
  %190 = vmatpush1.msra.mxu0 0.0
  %191 = vmatprep.subr.mxu0 0.0
  %192 = vmatpush1.msra.mxu0 0.0
  %193 = vmatprep.subr.mxu0 0.0
  %194 = vmatpush1.msra.mxu0 0.0
  %195 = vmatprep.subr.mxu0 0.0
  %196 = vmatpush1.msra.mxu0 0.0
  %197 = vmatprep.subr.mxu0 0.0
  %198 = vmatpush1.msra.mxu0 0.0
  %199 = vmatprep.subr.mxu0 0.0
  %200 = vmatpush1.msra.mxu0 0.0
  %201 = vmatprep.subr.mxu0 0.0
  %202 = vmatpush1.msra.mxu0 0.0
  %203 = vmatprep.mubr.f32.mxu0 0.0
  %204 = vmatmul.mubr.f32.gmra.mrb[0].mxu0 %v134
  %v205 = vpop.f32.mrb[0].mxu0
  %v206 = vadd.f32 %v130, %v205
  %v207 = vpop.f32.mrb[0].mxu0
  %208 = vmatprep.mubr.f32.mxu0 0.0
  %209 = vmatmul.mubr.f32.gmra.mrb[0].mxu0 %v137
  %v210 = vpop.f32.mrb[0].mxu0
  %v211 = vadd.f32 %v130, %v210
  %v212 = vpop.f32.mrb[0].mxu0
  %213 = vdwg.mxu0
  %vm214 = vcmask 64512
  %215 = vst.msk [vmem:[%s5] sm:$0xff] %vm214, %v206
  %216 = vst.msk [vmem:[%s5 + $0x8] sm:$0xff] %vm214, %v211
  // Predicated region
  $region22: #{regression_model_forward.1} parent=0 // pred_check
    _
  $region23: #{regression_model_forward.1} parent=0 // pred_check_branch
    %218 = sbr.rel (0) target = $region25
  $region24: #{regression_model_forward.1} parent=0 // pred_region
    _
  $region25: #{regression_model_forward.1} parent=0 // pred_fallthru
    _
  // Predicated region
  $region26: #{regression_model_forward.1} parent=0 // pred_check
    _
  $region27: #{regression_model_forward.1} parent=0 // pred_check_branch
    %220 = sbr.rel (0) target = $region29
  $region28: #{regression_model_forward.1} parent=0 // pred_region
    _
  $region29: #{regression_model_forward.1} parent=0 // pred_fallthru
    _

</llo_original>
